<compile_context>
chip_gen: v7x
topology: tpu7x:2x2x1
jax: 0.10.0
libtpu: 0.0.40
codegen_flags: <defaults>
</compile_context>

<pallas_src>
import jax
import jax.numpy as jnp
from jax.experimental import pallas as pl
from jax.experimental.pallas import tpu as pltpu

# ----------------------------- configuration -----------------------------
B = 2                                    # batch per branch
C = 3                                    # image channels
H = W = 16                               # spatial
PATCH = 4                                # patchify conv kernel == stride
P = (H // PATCH) * (W // PATCH)          # patches per image = 16
PATCH_DIM = C * PATCH * PATCH            # 48 (real)
PATCH_PAD = 128                          # lane-padded patch dim
FEATURE_DIM = 128                        # encoder num_features (synthetic)
HIDDEN_DIM = 64                          # projector hidden (real)
HIDDEN_PAD = 128                         # lane-padded hidden dim
PROJ_DIM = 32                            # projection_dim (real)
PROJ_PAD = 128                           # lane-padded projection dim
QUEUE_SIZE = 1024
LN_EPS = 1e-6                            # timm ConvNeXt LayerNorm eps

NB = 2 * B                               # total images (query + key branches)
M_ROWS = NB * P                          # 64: folded matmul M dim

# rows of the packed (8, 128) f32 parameter slab
ROW_B_STEM, ROW_LN_G, ROW_LN_B, ROW_B1, ROW_B2 = 0, 1, 2, 3, 4
SLAB_ROWS = 8                            # one full (8, 128) sublane tile


# ------------------------------ Pallas kernel ------------------------------
def _moco_kernel(patches_ref, w_stem_ref, slab_ref, w1_ref, w2_ref, out_ref):
    # patches_ref: (M_ROWS, PATCH_PAD)  bf16   query rows first, then key rows
    # w_stem_ref : (PATCH_PAD, FEATURE_DIM) bf16   zero rows beyond PATCH_DIM
    # slab_ref   : (SLAB_ROWS, 128)     f32    packed 1-row params
    # w1_ref     : (FEATURE_DIM, HIDDEN_PAD) bf16  zero cols beyond HIDDEN_DIM
    # w2_ref     : (HIDDEN_PAD, PROJ_PAD)    bf16  zero rows/cols beyond real
    # out_ref    : (NB, PROJ_PAD)       f32

    b_stem = slab_ref[ROW_B_STEM:ROW_B_STEM + 1, :]          # (1, 128) f32
    ln_g = slab_ref[ROW_LN_G:ROW_LN_G + 1, :]
    ln_b = slab_ref[ROW_LN_B:ROW_LN_B + 1, :]
    b1 = slab_ref[ROW_B1:ROW_B1 + 1, :]
    b2 = slab_ref[ROW_B2:ROW_B2 + 1, :]

    # --- encoder stem: patchify "conv" (stride == kernel -> matmul) + GELU ---
    # bf16 x bf16 -> f32 accumulate on the MXU, both branches in one M=64 push.
    h = jnp.dot(patches_ref[...], w_stem_ref[...],
                preferred_element_type=jnp.float32)           # (64, 128) f32
    h = h + b_stem
    # TODO(synk): timm ConvNeXt uses exact erf GELU; tanh approx used here.
    h = jax.nn.gelu(h, approximate=True)

    # --- global average pool over patches (per image) ---
    feat = jnp.mean(h.reshape(NB, P, FEATURE_DIM), axis=1)    # (4, 128) f32

    # --- LayerNorm over feature dim (eps matches timm ConvNeXt) ---
    mu = jnp.mean(feat, axis=-1, keepdims=True)
    d = feat - mu
    var = jnp.mean(d * d, axis=-1, keepdims=True)
    feat = d * jax.lax.rsqrt(var + LN_EPS) * ln_g + ln_b

    # --- projector: Linear -> ReLU -> Linear (bf16 MXU, f32 accumulate) ---
    z = jnp.dot(feat.astype(jnp.bfloat16), w1_ref[...],
                preferred_element_type=jnp.float32) + b1
    z = jnp.maximum(z, 0.0)
    z = jnp.dot(z.astype(jnp.bfloat16), w2_ref[...],
                preferred_element_type=jnp.float32) + b2
    # padded cols of z are exactly zero (zero weight cols + zero bias pad)

    # --- L2 normalize (torch F.normalize dim=1, eps=1e-12) via rsqrt ---
    ss = jnp.sum(z * z, axis=-1, keepdims=True)
    out_ref[...] = z * jax.lax.rsqrt(jnp.maximum(ss, 1e-24))  # 1/max(||z||,1e-12)


def _moco_pallas(patches, w_stem, slab, w1, w2):
    """patches: (M_ROWS, PATCH_PAD) bf16; rows [0:B*P)=query, [B*P:)=key."""
    return pl.pallas_call(
        _moco_kernel,
        out_shape=jax.ShapeDtypeStruct((NB, PROJ_PAD), jnp.float32),
        grid=(1,),                          # single step: whole problem in VMEM
        in_specs=[
            pl.BlockSpec((M_ROWS, PATCH_PAD), lambda i: (0, 0)),
            pl.BlockSpec((PATCH_PAD, FEATURE_DIM), lambda i: (0, 0)),
            pl.BlockSpec((SLAB_ROWS, 128), lambda i: (0, 0)),
            pl.BlockSpec((FEATURE_DIM, HIDDEN_PAD), lambda i: (0, 0)),
            pl.BlockSpec((HIDDEN_PAD, PROJ_PAD), lambda i: (0, 0)),
        ],
        out_specs=pl.BlockSpec((NB, PROJ_PAD), lambda i: (0, 0)),
    )(patches, w_stem, slab, w1, w2)


# ------------------------------- JAX glue ----------------------------------
def _patchify_pad_bf16(x_nchw):
    """(N,C,H,W) -> (N*P, PATCH_PAD) non-overlapping patches, lane-padded, bf16."""
    n = x_nchw.shape[0]
    x = x_nchw.reshape(n, C, H // PATCH, PATCH, W // PATCH, PATCH)
    x = x.transpose(0, 2, 4, 1, 3, 5)               # (N, H/p, W/p, C, p, p)
    x = x.reshape(n * P, PATCH_DIM)
    x = jnp.pad(x, ((0, 0), (0, PATCH_PAD - PATCH_DIM)))
    return x.astype(jnp.bfloat16)


def init_params(key):
    """Deterministic synthetic parameters.  The key encoder/projector are exact
    copies of the query ones (MoCoV3Model.__init__ copies param_q -> param_k),
    so one padded parameter set serves both branches.  Matmul weights stored
    bf16 (MXU-native); 1-row params stay f32 in the packed slab."""
    ks = jax.random.split(key, 6)
    scale = lambda fan_in: 1.0 / jnp.sqrt(fan_in)

    w_stem = jax.random.normal(ks[0], (PATCH_DIM, FEATURE_DIM), jnp.float32) * scale(PATCH_DIM)
    w_stem = jnp.pad(w_stem, ((0, PATCH_PAD - PATCH_DIM), (0, 0))).astype(jnp.bfloat16)

    b_stem = jnp.zeros((FEATURE_DIM,), jnp.float32)
    ln_g = jnp.ones((FEATURE_DIM,), jnp.float32)
    ln_b = jnp.zeros((FEATURE_DIM,), jnp.float32)

    w1 = jax.random.normal(ks[1], (FEATURE_DIM, HIDDEN_DIM), jnp.float32) * scale(FEATURE_DIM)
    w1 = jnp.pad(w1, ((0, 0), (0, HIDDEN_PAD - HIDDEN_DIM))).astype(jnp.bfloat16)
    b1 = jax.random.normal(ks[2], (HIDDEN_DIM,), jnp.float32) * 0.01
    b1 = jnp.pad(b1, (0, HIDDEN_PAD - HIDDEN_DIM))

    w2 = jax.random.normal(ks[3], (HIDDEN_DIM, PROJ_DIM), jnp.float32) * scale(HIDDEN_DIM)
    w2 = jnp.pad(w2, ((0, HIDDEN_PAD - HIDDEN_DIM), (0, PROJ_PAD - PROJ_DIM))).astype(jnp.bfloat16)
    b2 = jax.random.normal(ks[4], (PROJ_DIM,), jnp.float32) * 0.01
    b2 = jnp.pad(b2, (0, PROJ_PAD - PROJ_DIM))

    slab = jnp.zeros((SLAB_ROWS, 128), jnp.float32)
    slab = slab.at[ROW_B_STEM].set(b_stem)
    slab = slab.at[ROW_LN_G].set(ln_g)
    slab = slab.at[ROW_LN_B].set(ln_b)
    slab = slab.at[ROW_B1].set(b1)
    slab = slab.at[ROW_B2].set(b2)

    params = {"w_stem": w_stem, "slab": slab, "w1": w1, "w2": w2}

    # Normalized negative-key queue buffer (forward() does not use it; parity only).
    queue = jax.random.normal(ks[5], (QUEUE_SIZE, PROJ_DIM), jnp.float32)
    queue = queue / jnp.maximum(jnp.linalg.norm(queue, axis=1, keepdims=True), 1e-12)
    return params, queue


@jax.jit
def moco_forward(im_q, im_k, params):
    """Equivalent of MoCoV3Model.forward: returns (q, k), each (B, PROJ_DIM),
    row-wise L2-normalized.  Both branches run in ONE single-step pallas_call;
    the key branch (torch.no_grad) is detached with stop_gradient."""
    imgs = jnp.concatenate([im_q, im_k], axis=0)          # (2B, C, H, W)
    patches = _patchify_pad_bf16(imgs)                    # (2B*P, 128) bf16
    out = _moco_pallas(patches, params["w_stem"], params["slab"],
                       params["w1"], params["w2"])        # (2B, 128) f32
    q = out[:B, :PROJ_DIM]
    k = jax.lax.stop_gradient(out[B:, :PROJ_DIM])
    return q, k


# TODO(synk): full timm ConvNeXt-tiny backbone (depthwise 7x7 blocks, 4 stages)
# is not reproduced; a single patchify-stem + GELU + GAP + LayerNorm encoder
# stands in.  Momentum key-encoder update and queue dequeue/enqueue are
# stateful training utilities, not part of forward(), and are not implemented.

if __name__ == "__main__":
    key = jax.random.PRNGKey(0)
    k_params, k_q, k_k = jax.random.split(key, 3)
    params, queue = init_params(k_params)

    im_q = jax.random.normal(k_q, (B, C, H, W), jnp.float32)
    im_k = jax.random.normal(k_k, (B, C, H, W), jnp.float32)

    q, k = moco_forward(im_q, im_k, params)
    q = jax.block_until_ready(q)
    k = jax.block_until_ready(k)

    # sanity: shapes, finiteness, unit norms
    assert q.shape == (B, PROJ_DIM) and k.shape == (B, PROJ_DIM)
    assert jnp.all(jnp.isfinite(q)) and jnp.all(jnp.isfinite(k))
    assert jnp.allclose(jnp.linalg.norm(q, axis=1), 1.0, atol=1e-4)
    assert jnp.allclose(jnp.linalg.norm(k, axis=1), 1.0, atol=1e-4)

    print("KERNEL_OK")
</pallas_src>

<mosaic_0001>
module attributes {stable_mosaic.version = 11 : i64} {
  func.func @_moco_kernel(%arg0: i32, %arg1: memref<64x128xbf16, #tpu.memory_space<vmem>>, %arg2: memref<128x128xbf16, #tpu.memory_space<vmem>>, %arg3: memref<8x128xf32, #tpu.memory_space<vmem>>, %arg4: memref<128x128xbf16, #tpu.memory_space<vmem>>, %arg5: memref<128x128xbf16, #tpu.memory_space<vmem>>, %arg6: memref<4x128xf32, #tpu.memory_space<vmem>>) attributes {dimension_semantics = [#tpu.dimension_semantics<arbitrary>], iteration_bounds = array<i64: 1>, scalar_prefetch = 0 : i64, scratch_operands = 0 : i64, tpu.core_type = #tpu.core_type<tc>, window_params = [{pipeline_mode = #tpu.pipeline_mode<synchronous>, transform_indices = @transform_0, window_bounds = array<i64: 64, 128>}, {pipeline_mode = #tpu.pipeline_mode<synchronous>, transform_indices = @transform_1, window_bounds = array<i64: 128, 128>}, {pipeline_mode = #tpu.pipeline_mode<synchronous>, transform_indices = @transform_2, window_bounds = array<i64: 8, 128>}, {pipeline_mode = #tpu.pipeline_mode<synchronous>, transform_indices = @transform_3, window_bounds = array<i64: 128, 128>}, {pipeline_mode = #tpu.pipeline_mode<synchronous>, transform_indices = @transform_4, window_bounds = array<i64: 128, 128>}, {pipeline_mode = #tpu.pipeline_mode<synchronous>, transform_indices = @transform_5, window_bounds = array<i64: 4, 128>}]} {
    %c0 = arith.constant 0 : index
    %c0_0 = arith.constant 0 : index
    %0 = vector.load %arg3[%c0, %c0_0] : memref<8x128xf32, #tpu.memory_space<vmem>>, vector<1x128xf32>
    %c1 = arith.constant 1 : index
    %c0_1 = arith.constant 0 : index
    %1 = vector.load %arg3[%c1, %c0_1] : memref<8x128xf32, #tpu.memory_space<vmem>>, vector<1x128xf32>
    %c2 = arith.constant 2 : index
    %c0_2 = arith.constant 0 : index
    %2 = vector.load %arg3[%c2, %c0_2] : memref<8x128xf32, #tpu.memory_space<vmem>>, vector<1x128xf32>
    %c3 = arith.constant 3 : index
    %c0_3 = arith.constant 0 : index
    %3 = vector.load %arg3[%c3, %c0_3] : memref<8x128xf32, #tpu.memory_space<vmem>>, vector<1x128xf32>
    %c4 = arith.constant 4 : index
    %c0_4 = arith.constant 0 : index
    %4 = vector.load %arg3[%c4, %c0_4] : memref<8x128xf32, #tpu.memory_space<vmem>>, vector<1x128xf32>
    %c0_5 = arith.constant 0 : index
    %c0_6 = arith.constant 0 : index
    %5 = vector.load %arg1[%c0_5, %c0_6] : memref<64x128xbf16, #tpu.memory_space<vmem>>, vector<64x128xbf16>
    %c0_7 = arith.constant 0 : index
    %c0_8 = arith.constant 0 : index
    %6 = vector.load %arg2[%c0_7, %c0_8] : memref<128x128xbf16, #tpu.memory_space<vmem>>, vector<128x128xbf16>
    %cst = arith.constant dense<0.000000e+00> : vector<64x128xf32>
    %7 = tpu.matmul %5, %6, %cst {dimension_numbers = #tpu.dot_dimension_numbers<[1], [0], [0], [1], [0, 0, 1, 1], [], []>} : vector<64x128xbf16>, vector<128x128xbf16>, vector<64x128xf32> -> vector<64x128xf32>
    %8 = vector.broadcast %0 : vector<1x128xf32> to vector<64x128xf32>
    %9 = arith.addf %7, %8 : vector<64x128xf32>
    %10 = arith.mulf %9, %9 : vector<64x128xf32>
    %11 = arith.mulf %9, %10 : vector<64x128xf32>
    %cst_9 = arith.constant 4.471500e-02 : f32
    %12 = vector.broadcast %cst_9 : f32 to vector<64x128xf32>
    %13 = arith.mulf %12, %11 : vector<64x128xf32>
    %14 = arith.addf %9, %13 : vector<64x128xf32>
    %cst_10 = arith.constant 0.797884583 : f32
    %15 = vector.broadcast %cst_10 : f32 to vector<64x128xf32>
    %16 = arith.mulf %15, %14 : vector<64x128xf32>
    %17 = math.tanh %16 : vector<64x128xf32>
    %cst_11 = arith.constant 1.000000e+00 : f32
    %18 = vector.broadcast %cst_11 : f32 to vector<64x128xf32>
    %19 = arith.addf %18, %17 : vector<64x128xf32>
    %cst_12 = arith.constant 5.000000e-01 : f32
    %20 = vector.broadcast %cst_12 : f32 to vector<64x128xf32>
    %21 = arith.mulf %20, %19 : vector<64x128xf32>
    %22 = arith.mulf %9, %21 : vector<64x128xf32>
    %23 = vector.shape_cast %22 : vector<64x128xf32> to vector<4x16x128xf32>
    %cst_13 = arith.constant dense<0.000000e+00> : vector<4x128xf32>
    %24 = vector.multi_reduction <add>, %23, %cst_13 [1] : vector<4x16x128xf32> to vector<4x128xf32>
    %cst_14 = arith.constant 1.600000e+01 : f32
    %25 = vector.broadcast %cst_14 : f32 to vector<4x128xf32>
    %26 = arith.divf %24, %25 : vector<4x128xf32>
    %cst_15 = arith.constant dense<0.000000e+00> : vector<4xf32>
    %27 = vector.multi_reduction <add>, %26, %cst_15 [1] : vector<4x128xf32> to vector<4xf32>
    %28 = vector.shape_cast %27 : vector<4xf32> to vector<4x1xf32>
    %cst_16 = arith.constant 1.280000e+02 : f32
    %29 = vector.broadcast %cst_16 : f32 to vector<4x1xf32>
    %30 = arith.divf %28, %29 : vector<4x1xf32>
    %31 = vector.broadcast %30 : vector<4x1xf32> to vector<4x128xf32>
    %32 = arith.subf %26, %31 : vector<4x128xf32>
    %33 = arith.mulf %32, %32 : vector<4x128xf32>
    %cst_17 = arith.constant dense<0.000000e+00> : vector<4xf32>
    %34 = vector.multi_reduction <add>, %33, %cst_17 [1] : vector<4x128xf32> to vector<4xf32>
    %35 = vector.shape_cast %34 : vector<4xf32> to vector<4x1xf32>
    %cst_18 = arith.constant 1.280000e+02 : f32
    %36 = vector.broadcast %cst_18 : f32 to vector<4x1xf32>
    %37 = arith.divf %35, %36 : vector<4x1xf32>
    %cst_19 = arith.constant 9.99999997E-7 : f32
    %38 = vector.broadcast %cst_19 : f32 to vector<4x1xf32>
    %39 = arith.addf %37, %38 : vector<4x1xf32>
    %40 = math.rsqrt %39 : vector<4x1xf32>
    %41 = vector.broadcast %40 : vector<4x1xf32> to vector<4x128xf32>
    %42 = arith.mulf %32, %41 : vector<4x128xf32>
    %43 = vector.broadcast %1 : vector<1x128xf32> to vector<4x128xf32>
    %44 = arith.mulf %42, %43 : vector<4x128xf32>
    %45 = vector.broadcast %2 : vector<1x128xf32> to vector<4x128xf32>
    %46 = arith.addf %44, %45 : vector<4x128xf32>
    %47 = arith.truncf %46 : vector<4x128xf32> to vector<4x128xbf16>
    %c0_20 = arith.constant 0 : index
    %c0_21 = arith.constant 0 : index
    %48 = vector.load %arg4[%c0_20, %c0_21] : memref<128x128xbf16, #tpu.memory_space<vmem>>, vector<128x128xbf16>
    %cst_22 = arith.constant dense<0.000000e+00> : vector<4x128xf32>
    %49 = tpu.matmul %47, %48, %cst_22 {dimension_numbers = #tpu.dot_dimension_numbers<[1], [0], [0], [1], [0, 0, 1, 1], [], []>} : vector<4x128xbf16>, vector<128x128xbf16>, vector<4x128xf32> -> vector<4x128xf32>
    %50 = vector.broadcast %3 : vector<1x128xf32> to vector<4x128xf32>
    %51 = arith.addf %49, %50 : vector<4x128xf32>
    %cst_23 = arith.constant 0.000000e+00 : f32
    %52 = vector.broadcast %cst_23 : f32 to vector<4x128xf32>
    %53 = arith.maximumf %51, %52 : vector<4x128xf32>
    %54 = arith.truncf %53 : vector<4x128xf32> to vector<4x128xbf16>
    %c0_24 = arith.constant 0 : index
    %c0_25 = arith.constant 0 : index
    %55 = vector.load %arg5[%c0_24, %c0_25] : memref<128x128xbf16, #tpu.memory_space<vmem>>, vector<128x128xbf16>
    %cst_26 = arith.constant dense<0.000000e+00> : vector<4x128xf32>
    %56 = tpu.matmul %54, %55, %cst_26 {dimension_numbers = #tpu.dot_dimension_numbers<[1], [0], [0], [1], [0, 0, 1, 1], [], []>} : vector<4x128xbf16>, vector<128x128xbf16>, vector<4x128xf32> -> vector<4x128xf32>
    %57 = vector.broadcast %4 : vector<1x128xf32> to vector<4x128xf32>
    %58 = arith.addf %56, %57 : vector<4x128xf32>
    %59 = arith.mulf %58, %58 : vector<4x128xf32>
    %cst_27 = arith.constant dense<0.000000e+00> : vector<4xf32>
    %60 = vector.multi_reduction <add>, %59, %cst_27 [1] : vector<4x128xf32> to vector<4xf32>
    %61 = vector.shape_cast %60 : vector<4xf32> to vector<4x1xf32>
    %cst_28 = arith.constant 1.000000e-24 : f32
    %62 = vector.broadcast %cst_28 : f32 to vector<4x1xf32>
    %63 = arith.maximumf %61, %62 : vector<4x1xf32>
    %64 = math.rsqrt %63 : vector<4x1xf32>
    %65 = vector.broadcast %64 : vector<4x1xf32> to vector<4x128xf32>
    %66 = arith.mulf %58, %65 : vector<4x128xf32>
    %c0_29 = arith.constant 0 : index
    %c0_30 = arith.constant 0 : index
    %67 = vector.load %arg6[%c0_29, %c0_30] : memref<4x128xf32, #tpu.memory_space<vmem>>, vector<4x128xf32>
    tpu.vector_store %arg6[%c0_29, %c0_30], %66 {strides = array<i32>} : memref<4x128xf32, #tpu.memory_space<vmem>>, vector<4x128xf32>,
    return
  }
  func.func @transform_0(%arg0: i32) -> (i32, i32) {
    %c0_i32 = arith.constant 0 : i32
    %c0_i32_0 = arith.constant 0 : i32
    %c0_i32_1 = arith.constant 0 : i32
    return %c0_i32, %c0_i32_0 : i32, i32
  }
  func.func @transform_1(%arg0: i32) -> (i32, i32) {
    %c0_i32 = arith.constant 0 : i32
    %c0_i32_0 = arith.constant 0 : i32
    %c0_i32_1 = arith.constant 0 : i32
    return %c0_i32, %c0_i32_0 : i32, i32
  }
  func.func @transform_2(%arg0: i32) -> (i32, i32) {
    %c0_i32 = arith.constant 0 : i32
    %c0_i32_0 = arith.constant 0 : i32
    %c0_i32_1 = arith.constant 0 : i32
    return %c0_i32, %c0_i32_0 : i32, i32
  }
  func.func @transform_3(%arg0: i32) -> (i32, i32) {
    %c0_i32 = arith.constant 0 : i32
    %c0_i32_0 = arith.constant 0 : i32
    %c0_i32_1 = arith.constant 0 : i32
    return %c0_i32, %c0_i32_0 : i32, i32
  }
  func.func @transform_4(%arg0: i32) -> (i32, i32) {
    %c0_i32 = arith.constant 0 : i32
    %c0_i32_0 = arith.constant 0 : i32
    %c0_i32_1 = arith.constant 0 : i32
    return %c0_i32, %c0_i32_0 : i32, i32
  }
  func.func @transform_5(%arg0: i32) -> (i32, i32) {
    %c0_i32 = arith.constant 0 : i32
    %c0_i32_0 = arith.constant 0 : i32
    %c0_i32_1 = arith.constant 0 : i32
    return %c0_i32, %c0_i32_0 : i32, i32
  }
}

</mosaic_0001>

<llo_original>
// kernel: moco_forward.1
$region0: #{moco_forward.1}
  #allocation0 [shape = 'u32[]', space=smem, size = 0x4, offset = 0x4, fixed_abs, tag = 'smem constant byte address 0x4 - core index']
  #allocation1 [shape = 'u32[144,128]{1,0:T(1,128)}', space=vmem, size = 0x12000, scoped, tag = 'internal scratch']
  %s0 = inlined_call_operand.vmem [shape: bf16[64,128], index: 0, kind: input, shape index: {}]
  %s1 = inlined_call_operand.vmem [shape: bf16[128,128], index: 1, kind: input, shape index: {}]
  %s2 = inlined_call_operand.vmem [shape: f32[8,128], index: 2, kind: input, shape index: {}]
  %s3 = inlined_call_operand.vmem [shape: bf16[128,128], index: 3, kind: input, shape index: {}]
  %s4 = inlined_call_operand.vmem [shape: bf16[128,128], index: 4, kind: input, shape index: {}]
  %s5 = inlined_call_operand.vmem [shape: f32[4,128], index: 5, kind: output, shape index: {}]
  %s6 = sld [smem:[#allocation0]]
  $region30: #{moco_forward.1} parent=0
    _
  %s8 = ssub.s32 1, %s6
  %s9 = scalar_select 0, %s8, %s6
  // Predicated region
  $region2: #{moco_forward.1} parent=0 // pred_check
    _
  $region3: #{moco_forward.1} parent=0 // pred_check_branch
    %11 = sbr.rel (0) target = $region5
  $region4: #{moco_forward.1} parent=0 // pred_region
    _
  $region5: #{moco_forward.1} parent=0 // pred_fallthru
    _
  // Predicated region
  $region6: #{moco_forward.1} parent=0 // pred_check
    _
  $region7: #{moco_forward.1} parent=0 // pred_check_branch
    %13 = sbr.rel (0) target = $region9
  $region8: #{moco_forward.1} parent=0 // pred_region
    _
  $region9: #{moco_forward.1} parent=0 // pred_fallthru
    _
  // Predicated region
  $region10: #{moco_forward.1} parent=0 // pred_check
    _
  $region11: #{moco_forward.1} parent=0 // pred_check_branch
    %15 = sbr.rel (0) target = $region13
  $region12: #{moco_forward.1} parent=0 // pred_region
    _
  $region13: #{moco_forward.1} parent=0 // pred_fallthru
    _
  // Predicated region
  $region14: #{moco_forward.1} parent=0 // pred_check
    _
  $region15: #{moco_forward.1} parent=0 // pred_check_branch
    %17 = sbr.rel (0) target = $region17
  $region16: #{moco_forward.1} parent=0 // pred_region
    _
  $region17: #{moco_forward.1} parent=0 // pred_fallthru
    _
  // Predicated region
  $region18: #{moco_forward.1} parent=0 // pred_check
    _
  $region19: #{moco_forward.1} parent=0 // pred_check_branch
    %19 = sbr.rel (0) target = $region21
  $region20: #{moco_forward.1} parent=0 // pred_region
    _
  $region21: #{moco_forward.1} parent=0 // pred_fallthru
    _
  %v21 = vld [vmem:[%s2] sm:$0x1]
  %v22 = vld [vmem:[%s2 + $0x1] sm:$0x1]
  %v23 = vld [vmem:[%s2 + $0x2] sm:$0x1]
  %v24 = vld [vmem:[%s2 + $0x3] sm:$0x1]
  %v25 = vld [vmem:[%s2 + $0x4] sm:$0x1]
  %v26 = vld [vmem:[%s0] sm:$0xf]
  %v27 = vld [vmem:[%s0 + $0x4] sm:$0xf]
  %v28 = vld [vmem:[%s0 + $0x8] sm:$0xf]
  %v29 = vld [vmem:[%s0 + $0xc] sm:$0xf]
  %v30 = vld [vmem:[%s0 + $0x10] sm:$0xf]
  %v31 = vld [vmem:[%s0 + $0x14] sm:$0xf]
  %v32 = vld [vmem:[%s0 + $0x18] sm:$0xf]
  %v33 = vld [vmem:[%s0 + $0x1c] sm:$0xf]
  %v34 = vld [vmem:[%s1] sm:$0xf]
  %v35 = vld [vmem:[%s1 + $0x4] sm:$0xf]
  %v36 = vld [vmem:[%s1 + $0x8] sm:$0xf]
  %v37 = vld [vmem:[%s1 + $0xc] sm:$0xf]
  %v38 = vld [vmem:[%s1 + $0x10] sm:$0xf]
  %v39 = vld [vmem:[%s1 + $0x14] sm:$0xf]
  %v40 = vld [vmem:[%s1 + $0x18] sm:$0xf]
  %v41 = vld [vmem:[%s1 + $0x1c] sm:$0xf]
  %v42 = vld [vmem:[%s1 + $0x20] sm:$0xf]
  %v43 = vld [vmem:[%s1 + $0x24] sm:$0xf]
  %v44 = vld [vmem:[%s1 + $0x28] sm:$0xf]
  %v45 = vld [vmem:[%s1 + $0x2c] sm:$0xf]
  %v46 = vld [vmem:[%s1 + $0x30] sm:$0xf]
  %v47 = vld [vmem:[%s1 + $0x34] sm:$0xf]
  %v48 = vld [vmem:[%s1 + $0x38] sm:$0xf]
  %v49 = vld [vmem:[%s1 + $0x3c] sm:$0xf]
  %v50 = vlaneseq
  %v51 = vshrl.u32 %v50, 7
  %v52 = vsub.s32 0, %v51
  %v53 = vrot.slane %v21, %v52
  %v62 = vunpack.c.l.b16 %v26
  %v63 = vunpack.c.l.b16 %v27
  %v64 = vunpack.c.l.b16 %v28
  %v65 = vunpack.c.l.b16 %v29
  %v66 = vunpack.c.l.b16 %v30
  %v67 = vunpack.c.l.b16 %v31
  %v68 = vunpack.c.l.b16 %v32
  %v69 = vunpack.c.l.b16 %v33
  %v70 = vpack.c.b16 %v63, %v62
  %v71 = vpack.c.b16 %v65, %v64
  %v72 = vpack.c.b16 %v67, %v66
  %v73 = vpack.c.b16 %v69, %v68
  %v94 = vunpack.c.l.b16 %v34
  %v95 = vunpack.c.l.b16 %v35
  %v96 = vunpack.c.l.b16 %v36
  %v97 = vunpack.c.l.b16 %v37
  %v98 = vunpack.c.l.b16 %v38
  %v99 = vunpack.c.l.b16 %v39
  %v100 = vunpack.c.l.b16 %v40
  %v101 = vunpack.c.l.b16 %v41
  %v102 = vunpack.c.l.b16 %v42
  %v103 = vunpack.c.l.b16 %v43
  %v104 = vunpack.c.l.b16 %v44
  %v105 = vunpack.c.l.b16 %v45
  %v106 = vunpack.c.l.b16 %v46
  %v107 = vunpack.c.l.b16 %v47
  %v108 = vunpack.c.l.b16 %v48
  %v109 = vunpack.c.l.b16 %v49
  %v110 = vpack.c.b16 %v95, %v94
  %v111 = vpack.c.b16 %v97, %v96
  %v112 = vpack.c.b16 %v99, %v98
  %v113 = vpack.c.b16 %v101, %v100
  %v114 = vpack.c.b16 %v103, %v102
  %v115 = vpack.c.b16 %v105, %v104
  %v116 = vpack.c.b16 %v107, %v106
  %v117 = vpack.c.b16 %v109, %v108
  %126 = vmatprep.subr.bf16.mxu0 0
  %127 = vmatpush1.bf16.msra.mxu0 %v110
  %128 = vmatprep.subr.bf16.mxu0 0
  %129 = vmatpush1.bf16.msra.mxu0 %v111
  %130 = vmatprep.subr.bf16.mxu0 0
  %131 = vmatpush1.bf16.msra.mxu0 %v112
  %132 = vmatprep.subr.bf16.mxu0 0
  %133 = vmatpush1.bf16.msra.mxu0 %v113
  %134 = vmatprep.subr.bf16.mxu0 0
  %135 = vmatpush1.bf16.msra.mxu0 %v114
  %136 = vmatprep.subr.bf16.mxu0 0
  %137 = vmatpush1.bf16.msra.mxu0 %v115
  %138 = vmatprep.subr.bf16.mxu0 0
  %139 = vmatpush1.bf16.msra.mxu0 %v116
  %140 = vmatprep.subr.bf16.mxu0 0
  %141 = vmatpush1.bf16.msra.mxu0 %v117
  %142 = vmatprep.subr.bf16.mxu0 0
  %143 = vmatpush1.bf16.msra.mxu0 0
  %144 = vmatprep.subr.bf16.mxu0 0
  %145 = vmatpush1.bf16.msra.mxu0 0
  %146 = vmatprep.subr.bf16.mxu0 0
  %147 = vmatpush1.bf16.msra.mxu0 0
  %148 = vmatprep.subr.bf16.mxu0 0
  %149 = vmatpush1.bf16.msra.mxu0 0
  %150 = vmatprep.subr.bf16.mxu0 0
  %151 = vmatpush1.bf16.msra.mxu0 0
  %152 = vmatprep.subr.bf16.mxu0 0
  %153 = vmatpush1.bf16.msra.mxu0 0
  %154 = vmatprep.subr.bf16.mxu0 0
  %155 = vmatpush1.bf16.msra.mxu0 0
  %156 = vmatprep.subr.bf16.mxu0 0
  %157 = vmatpush1.bf16.msra.mxu0 0
  %158 = vmatprep.mubr.bf16.mxu0 0
  %159 = vmatmul.mubr.bf16.gmra.mrb[0].mxu0 %v70
  %v160 = vpop.f32.mrb[0].mxu0
  %v161 = vadd.f32 %v53, %v160
  %v162 = vpop.f32.mrb[0].mxu0
  %v163 = vpop.f32.mrb[0].mxu0
  %v164 = vadd.f32 %v53, %v163
  %v165 = vpop.f32.mrb[0].mxu0
  %166 = vmatprep.mubr.bf16.mxu0 0
  %167 = vmatmul.mubr.bf16.gmra.mrb[0].mxu0 %v71
  %v168 = vpop.f32.mrb[0].mxu0
  %v169 = vadd.f32 %v53, %v168
  %v170 = vpop.f32.mrb[0].mxu0
  %v171 = vpop.f32.mrb[0].mxu0
  %v172 = vadd.f32 %v53, %v171
  %v173 = vpop.f32.mrb[0].mxu0
  %174 = vmatprep.mubr.bf16.mxu0 0
  %175 = vmatmul.mubr.bf16.gmra.mrb[0].mxu0 %v72
  %v176 = vpop.f32.mrb[0].mxu0
  %v177 = vadd.f32 %v53, %v176
  %v178 = vpop.f32.mrb[0].mxu0
  %v179 = vpop.f32.mrb[0].mxu0
  %v180 = vadd.f32 %v53, %v179
  %v181 = vpop.f32.mrb[0].mxu0
  %182 = vmatprep.mubr.bf16.mxu0 0
  %183 = vmatmul.mubr.bf16.gmra.mrb[0].mxu0 %v73
  %v184 = vpop.f32.mrb[0].mxu0
  %v185 = vadd.f32 %v53, %v184
  %v186 = vpop.f32.mrb[0].mxu0
  %v187 = vpop.f32.mrb[0].mxu0
  %v188 = vadd.f32 %v53, %v187
  %v189 = vpop.f32.mrb[0].mxu0
  %190 = vdwg.mxu0
  %v191 = vmul.f32 %v161, %v161
  %v192 = vmul.f32 %v164, %v164
  %v193 = vmul.f32 %v169, %v169
  %v194 = vmul.f32 %v172, %v172
  %v195 = vmul.f32 %v177, %v177
  %v196 = vmul.f32 %v180, %v180
  %v197 = vmul.f32 %v185, %v185
  %v198 = vmul.f32 %v188, %v188
  %v199 = vmul.f32 %v161, %v191
  %v200 = vmul.f32 %v164, %v192
  %v201 = vmul.f32 %v169, %v193
  %v202 = vmul.f32 %v172, %v194
  %v203 = vmul.f32 %v177, %v195
  %v204 = vmul.f32 %v180, %v196
  %v205 = vmul.f32 %v185, %v197
  %v206 = vmul.f32 %v188, %v198
  %v207 = vmul.f32 %v199, 0.044715
  %v208 = vmul.f32 %v200, 0.044715
  %v209 = vmul.f32 %v201, 0.044715
  %v210 = vmul.f32 %v202, 0.044715
  %v211 = vmul.f32 %v203, 0.044715
  %v212 = vmul.f32 %v204, 0.044715
  %v213 = vmul.f32 %v205, 0.044715
  %v214 = vmul.f32 %v206, 0.044715
  %v215 = vadd.f32 %v161, %v207
  %v216 = vadd.f32 %v164, %v208
  %v217 = vadd.f32 %v169, %v209
  %v218 = vadd.f32 %v172, %v210
  %v219 = vadd.f32 %v177, %v211
  %v220 = vadd.f32 %v180, %v212
  %v221 = vadd.f32 %v185, %v213
  %v222 = vadd.f32 %v188, %v214
  %v223 = vmul.f32 %v215, 0.7978846
  %v224 = vmul.f32 %v216, 0.7978846
  %v225 = vmul.f32 %v217, 0.7978846
  %v226 = vmul.f32 %v218, 0.7978846
  %v227 = vmul.f32 %v219, 0.7978846
  %v228 = vmul.f32 %v220, 0.7978846
  %v229 = vmul.f32 %v221, 0.7978846
  %v230 = vmul.f32 %v222, 0.7978846
  %v231 = vtanh.pop %v223
  %v232 = vtanh.pop %v224
  %v233 = vtanh.pop %v225
  %v234 = vtanh.pop %v226
  %v235 = vtanh.pop %v227
  %v236 = vtanh.pop %v228
  %v237 = vtanh.pop %v229
  %v238 = vtanh.pop %v230
  %v239 = vadd.f32 %v231, 1.0
  %v240 = vadd.f32 %v232, 1.0
  %v241 = vadd.f32 %v233, 1.0
  %v242 = vadd.f32 %v234, 1.0
  %v243 = vadd.f32 %v235, 1.0
  %v244 = vadd.f32 %v236, 1.0
  %v245 = vadd.f32 %v237, 1.0
  %v246 = vadd.f32 %v238, 1.0
  %v247 = vmul.f32 %v239, 0.5
  %v248 = vmul.f32 %v240, 0.5
  %v249 = vmul.f32 %v241, 0.5
  %v250 = vmul.f32 %v242, 0.5
  %v251 = vmul.f32 %v243, 0.5
  %v252 = vmul.f32 %v244, 0.5
  %v253 = vmul.f32 %v245, 0.5
  %v254 = vmul.f32 %v246, 0.5
  %v255 = vmul.f32 %v161, %v247
  %v256 = vmul.f32 %v164, %v248
  %v257 = vmul.f32 %v169, %v249
  %v258 = vmul.f32 %v172, %v250
  %v259 = vmul.f32 %v177, %v251
  %v260 = vmul.f32 %v180, %v252
  %v261 = vmul.f32 %v185, %v253
  %v262 = vmul.f32 %v188, %v254
  %v263 = vadd.f32 %v255, %v256
  %v264 = vrot.slane %v263, 4
  %v265 = vadd.f32 %v263, %v264
  %v266 = vrot.slane %v265, 2
  %v267 = vadd.f32 %v265, %v266
  %v268 = vrot.slane %v267, 1
  %v269 = vadd.f32 %v267, %v268
  %v270 = vadd.f32 %v257, %v258
  %v271 = vrot.slane %v270, 4
  %v272 = vadd.f32 %v270, %v271
  %v273 = vrot.slane %v272, 2
  %v274 = vadd.f32 %v272, %v273
  %v275 = vrot.slane %v274, 1
  %v276 = vadd.f32 %v274, %v275
  %v277 = vadd.f32 %v259, %v260
  %v278 = vrot.slane %v277, 4
  %v279 = vadd.f32 %v277, %v278
  %v280 = vrot.slane %v279, 2
  %v281 = vadd.f32 %v279, %v280
  %v282 = vrot.slane %v281, 1
  %v283 = vadd.f32 %v281, %v282
  %v284 = vadd.f32 %v261, %v262
  %v285 = vrot.slane %v284, 4
  %v286 = vadd.f32 %v284, %v285
  %v287 = vrot.slane %v286, 2
  %v288 = vadd.f32 %v286, %v287
  %v289 = vrot.slane %v288, 1
  %v290 = vadd.f32 %v288, %v289
  %v291 = vrcp.pop 16.0
  %v292 = vmul.f32 %v269, %v291
  %v293 = vmul.f32 %v276, %v291
  %v294 = vmul.f32 %v283, %v291
  %v295 = vmul.f32 %v290, %v291
  %vm300 = vcmask 1041409
  %v301 = vsel %vm300, %v293, %v292
  %vm302 = vcmask 1042434
  %v303 = vsel %vm302, %v294, %v301
  %vm304 = vcmask 1043459
  %v305 = vsel %vm304, %v295, %v303
  %vm307 = vcmask 1043456
  %v308 = vsel %vm307, %v305, 0.0
  %309 = vadd.xlane.f32.xlu0 %v308
  %v310 = vpop.xlane.xlu0 %309
  %v311 = vrcp.pop 128.0
  %v312 = vmul.f32 %v310, %v311
  %v314 = vrot.slane %v312, 1
  %v315 = vrot.slane %v312, 2
  %v316 = vrot.slane %v312, 3
  %v321 = vsub.f32 %v292, %v312
  %v322 = vsub.f32 %v293, %v314
  %v323 = vsub.f32 %v294, %v315
  %v324 = vsub.f32 %v295, %v316
  %v325 = vmul.f32 %v321, %v321
  %v326 = vmul.f32 %v322, %v322
  %v327 = vmul.f32 %v323, %v323
  %v328 = vmul.f32 %v324, %v324
  %v333 = vrot.slane %v326, 7
  %v334 = vsel %vm300, %v333, %v325
  %v335 = vrot.slane %v327, 6
  %v336 = vsel %vm302, %v335, %v334
  %v337 = vrot.slane %v328, 5
  %v338 = vsel %vm304, %v337, %v336
  %v340 = vsel %vm307, %v338, 0.0
  %341 = vadd.xlane.f32.xlu0 %v340
  %v342 = vpop.xlane.xlu0 %341
  %v343 = vmul.f32 %v342, %v311
  %v344 = vadd.f32 %v343, 1e-06
  %v345 = vrsqrt.pop %v344
  %v347 = vrot.slane %v345, 1
  %v348 = vrot.slane %v345, 2
  %v349 = vrot.slane %v345, 3
  %v354 = vmul.f32 %v321, %v345
  %v355 = vmul.f32 %v322, %v347
  %v356 = vmul.f32 %v323, %v348
  %v357 = vmul.f32 %v324, %v349
  %v358 = vlaneseq
  %v359 = vshrl.u32 %v358, 7
  %v360 = vsub.s32 0, %v359
  %v361 = vrot.slane %v22, %v360
  %v362 = vmul.f32 %v354, %v361
  %v363 = vmul.f32 %v355, %v361
  %v364 = vmul.f32 %v356, %v361
  %v365 = vmul.f32 %v357, %v361
  %v366 = vlaneseq
  %v367 = vshrl.u32 %v366, 7
  %v368 = vsub.s32 0, %v367
  %v369 = vrot.slane %v23, %v368
  %v370 = vadd.f32 %v362, %v369
  %v371 = vadd.f32 %v363, %v369
  %v372 = vadd.f32 %v364, %v369
  %v373 = vadd.f32 %v365, %v369
  %v374 = vpack.c.bf16 %v370, %v370
  %v375 = vpack.c.bf16 %v371, %v371
  %v376 = vpack.c.bf16 %v372, %v372
  %v377 = vpack.c.bf16 %v373, %v373
  %v378 = vld [vmem:[%s3] sm:$0xf]
  %v379 = vld [vmem:[%s3 + $0x4] sm:$0xf]
  %v380 = vld [vmem:[%s3 + $0x8] sm:$0xf]
  %v381 = vld [vmem:[%s3 + $0xc] sm:$0xf]
  %v382 = vld [vmem:[%s3 + $0x10] sm:$0xf]
  %v383 = vld [vmem:[%s3 + $0x14] sm:$0xf]
  %v384 = vld [vmem:[%s3 + $0x18] sm:$0xf]
  %v385 = vld [vmem:[%s3 + $0x1c] sm:$0xf]
  %v386 = vld [vmem:[%s3 + $0x20] sm:$0xf]
  %v387 = vld [vmem:[%s3 + $0x24] sm:$0xf]
  %v388 = vld [vmem:[%s3 + $0x28] sm:$0xf]
  %v389 = vld [vmem:[%s3 + $0x2c] sm:$0xf]
  %v390 = vld [vmem:[%s3 + $0x30] sm:$0xf]
  %v391 = vld [vmem:[%s3 + $0x34] sm:$0xf]
  %v392 = vld [vmem:[%s3 + $0x38] sm:$0xf]
  %v393 = vld [vmem:[%s3 + $0x3c] sm:$0xf]
  %v394 = vlaneseq
  %v395 = vshrl.u32 %v394, 7
  %v396 = vsub.s32 0, %v395
  %v397 = vrot.slane %v24, %v396
  %v402 = vunpack.c.l.b16 %v374
  %v403 = vunpack.c.l.b16 %v375
  %v404 = vunpack.c.l.b16 %v376
  %v405 = vunpack.c.l.b16 %v377
  %v406 = vrot.slane %v403, 7
  %v407 = vsel %vm300, %v406, %v402
  %v408 = vrot.slane %v404, 6
  %v409 = vsel %vm302, %v408, %v407
  %v410 = vrot.slane %v405, 5
  %v411 = vsel %vm304, %v410, %v409
  %v412 = vpack.c.b16 %v411, %v411
  %v430 = vunpack.c.l.b16 %v378
  %v431 = vunpack.c.l.b16 %v379
  %v432 = vunpack.c.l.b16 %v380
  %v433 = vunpack.c.l.b16 %v381
  %v434 = vunpack.c.l.b16 %v382
  %v435 = vunpack.c.l.b16 %v383
  %v436 = vunpack.c.l.b16 %v384
  %v437 = vunpack.c.l.b16 %v385
  %v438 = vunpack.c.l.b16 %v386
  %v439 = vunpack.c.l.b16 %v387
  %v440 = vunpack.c.l.b16 %v388
  %v441 = vunpack.c.l.b16 %v389
  %v442 = vunpack.c.l.b16 %v390
  %v443 = vunpack.c.l.b16 %v391
  %v444 = vunpack.c.l.b16 %v392
  %v445 = vunpack.c.l.b16 %v393
  %v446 = vpack.c.b16 %v431, %v430
  %v447 = vpack.c.b16 %v433, %v432
  %v448 = vpack.c.b16 %v435, %v434
  %v449 = vpack.c.b16 %v437, %v436
  %v450 = vpack.c.b16 %v439, %v438
  %v451 = vpack.c.b16 %v441, %v440
  %v452 = vpack.c.b16 %v443, %v442
  %v453 = vpack.c.b16 %v445, %v444
  %462 = vmatprep.subr.bf16.mxu0 0
  %463 = vmatpush1.bf16.msra.mxu0 %v446
  %464 = vmatprep.subr.bf16.mxu0 0
  %465 = vmatpush1.bf16.msra.mxu0 %v447
  %466 = vmatprep.subr.bf16.mxu0 0
  %467 = vmatpush1.bf16.msra.mxu0 %v448
  %468 = vmatprep.subr.bf16.mxu0 0
  %469 = vmatpush1.bf16.msra.mxu0 %v449
  %470 = vmatprep.subr.bf16.mxu0 0
  %471 = vmatpush1.bf16.msra.mxu0 %v450
  %472 = vmatprep.subr.bf16.mxu0 0
  %473 = vmatpush1.bf16.msra.mxu0 %v451
  %474 = vmatprep.subr.bf16.mxu0 0
  %475 = vmatpush1.bf16.msra.mxu0 %v452
  %476 = vmatprep.subr.bf16.mxu0 0
  %477 = vmatpush1.bf16.msra.mxu0 %v453
  %478 = vmatprep.subr.bf16.mxu0 0
  %479 = vmatpush1.bf16.msra.mxu0 0
  %480 = vmatprep.subr.bf16.mxu0 0
  %481 = vmatpush1.bf16.msra.mxu0 0
  %482 = vmatprep.subr.bf16.mxu0 0
  %483 = vmatpush1.bf16.msra.mxu0 0
  %484 = vmatprep.subr.bf16.mxu0 0
  %485 = vmatpush1.bf16.msra.mxu0 0
  %486 = vmatprep.subr.bf16.mxu0 0
  %487 = vmatpush1.bf16.msra.mxu0 0
  %488 = vmatprep.subr.bf16.mxu0 0
  %489 = vmatpush1.bf16.msra.mxu0 0
  %490 = vmatprep.subr.bf16.mxu0 0
  %491 = vmatpush1.bf16.msra.mxu0 0
  %492 = vmatprep.subr.bf16.mxu0 0
  %493 = vmatpush1.bf16.msra.mxu0 0
  %494 = vmatprep.mubr.bf16.mxu0 0
  %495 = vmatmul.mubr.bf16.gmra.mrb[0].mxu0 %v412
  %v496 = vpop.f32.mrb[0].mxu0
  %v497 = vadd.f32 %v397, %v496
  %v498 = vpop.f32.mrb[0].mxu0
  %v499 = vpop.f32.mrb[0].mxu0
  %v500 = vpop.f32.mrb[0].mxu0
  %501 = vdwg.mxu0
  %v502 = vmax.f32 %v497, 0.0
  %v503 = vpack.c.bf16 %v502, %v502
  %v504 = vld [vmem:[%s4] sm:$0xf]
  %v505 = vld [vmem:[%s4 + $0x4] sm:$0xf]
  %v506 = vld [vmem:[%s4 + $0x8] sm:$0xf]
  %v507 = vld [vmem:[%s4 + $0xc] sm:$0xf]
  %v508 = vld [vmem:[%s4 + $0x10] sm:$0xf]
  %v509 = vld [vmem:[%s4 + $0x14] sm:$0xf]
  %v510 = vld [vmem:[%s4 + $0x18] sm:$0xf]
  %v511 = vld [vmem:[%s4 + $0x1c] sm:$0xf]
  %v512 = vld [vmem:[%s4 + $0x20] sm:$0xf]
  %v513 = vld [vmem:[%s4 + $0x24] sm:$0xf]
  %v514 = vld [vmem:[%s4 + $0x28] sm:$0xf]
  %v515 = vld [vmem:[%s4 + $0x2c] sm:$0xf]
  %v516 = vld [vmem:[%s4 + $0x30] sm:$0xf]
  %v517 = vld [vmem:[%s4 + $0x34] sm:$0xf]
  %v518 = vld [vmem:[%s4 + $0x38] sm:$0xf]
  %v519 = vld [vmem:[%s4 + $0x3c] sm:$0xf]
  %v520 = vlaneseq
  %v521 = vshrl.u32 %v520, 7
  %v522 = vsub.s32 0, %v521
  %v523 = vrot.slane %v25, %v522
  %v540 = vunpack.c.l.b16 %v504
  %v541 = vunpack.c.l.b16 %v505
  %v542 = vunpack.c.l.b16 %v506
  %v543 = vunpack.c.l.b16 %v507
  %v544 = vunpack.c.l.b16 %v508
  %v545 = vunpack.c.l.b16 %v509
  %v546 = vunpack.c.l.b16 %v510
  %v547 = vunpack.c.l.b16 %v511
  %v548 = vunpack.c.l.b16 %v512
  %v549 = vunpack.c.l.b16 %v513
  %v550 = vunpack.c.l.b16 %v514
  %v551 = vunpack.c.l.b16 %v515
  %v552 = vunpack.c.l.b16 %v516
  %v553 = vunpack.c.l.b16 %v517
  %v554 = vunpack.c.l.b16 %v518
  %v555 = vunpack.c.l.b16 %v519
  %v556 = vpack.c.b16 %v541, %v540
  %v557 = vpack.c.b16 %v543, %v542
  %v558 = vpack.c.b16 %v545, %v544
  %v559 = vpack.c.b16 %v547, %v546
  %v560 = vpack.c.b16 %v549, %v548
  %v561 = vpack.c.b16 %v551, %v550
  %v562 = vpack.c.b16 %v553, %v552
  %v563 = vpack.c.b16 %v555, %v554
  %572 = vmatprep.subr.bf16.mxu0 0
  %573 = vmatpush1.bf16.msra.mxu0 %v556
  %574 = vmatprep.subr.bf16.mxu0 0
  %575 = vmatpush1.bf16.msra.mxu0 %v557
  %576 = vmatprep.subr.bf16.mxu0 0
  %577 = vmatpush1.bf16.msra.mxu0 %v558
  %578 = vmatprep.subr.bf16.mxu0 0
  %579 = vmatpush1.bf16.msra.mxu0 %v559
  %580 = vmatprep.subr.bf16.mxu0 0
  %581 = vmatpush1.bf16.msra.mxu0 %v560
  %582 = vmatprep.subr.bf16.mxu0 0
  %583 = vmatpush1.bf16.msra.mxu0 %v561
  %584 = vmatprep.subr.bf16.mxu0 0
  %585 = vmatpush1.bf16.msra.mxu0 %v562
  %586 = vmatprep.subr.bf16.mxu0 0
  %587 = vmatpush1.bf16.msra.mxu0 %v563
  %588 = vmatprep.subr.bf16.mxu0 0
  %589 = vmatpush1.bf16.msra.mxu0 0
  %590 = vmatprep.subr.bf16.mxu0 0
  %591 = vmatpush1.bf16.msra.mxu0 0
  %592 = vmatprep.subr.bf16.mxu0 0
  %593 = vmatpush1.bf16.msra.mxu0 0
  %594 = vmatprep.subr.bf16.mxu0 0
  %595 = vmatpush1.bf16.msra.mxu0 0
  %596 = vmatprep.subr.bf16.mxu0 0
  %597 = vmatpush1.bf16.msra.mxu0 0
  %598 = vmatprep.subr.bf16.mxu0 0
  %599 = vmatpush1.bf16.msra.mxu0 0
  %600 = vmatprep.subr.bf16.mxu0 0
  %601 = vmatpush1.bf16.msra.mxu0 0
  %602 = vmatprep.subr.bf16.mxu0 0
  %603 = vmatpush1.bf16.msra.mxu0 0
  %604 = vmatprep.mubr.bf16.mxu0 0
  %605 = vmatmul.mubr.bf16.gmra.mrb[0].mxu0 %v503
  %v606 = vpop.f32.mrb[0].mxu0
  %v607 = vadd.f32 %v523, %v606
  %v608 = vpop.f32.mrb[0].mxu0
  %v609 = vpop.f32.mrb[0].mxu0
  %v610 = vpop.f32.mrb[0].mxu0
  %611 = vdwg.mxu0
  %v612 = vmul.f32 %v607, %v607
  %v613 = vsel %vm307, %v612, 0.0
  %614 = vadd.xlane.f32.xlu0 %v613
  %v615 = vpop.xlane.xlu0 %614
  %v616 = vmax.f32 %v615, 1e-24
  %v617 = vrsqrt.pop %v616
  %v618 = vmul.f32 %v607, %v617
  %619 = vst [vmem:[%s5] sm:$0xf] %v618
  // Predicated region
  $region22: #{moco_forward.1} parent=0 // pred_check
    _
  $region23: #{moco_forward.1} parent=0 // pred_check_branch
    %621 = sbr.rel (0) target = $region25
  $region24: #{moco_forward.1} parent=0 // pred_region
    _
  $region25: #{moco_forward.1} parent=0 // pred_fallthru
    _
  // Predicated region
  $region26: #{moco_forward.1} parent=0 // pred_check
    _
  $region27: #{moco_forward.1} parent=0 // pred_check_branch
    %623 = sbr.rel (0) target = $region29
  $region28: #{moco_forward.1} parent=0 // pred_region
    _
  $region29: #{moco_forward.1} parent=0 // pred_fallthru
    _

</llo_original>
